<compile_context>
chip_gen: v6e
topology: v6e:2x2x1
jax: 0.10.0
libtpu: 0.0.40
codegen_flags: <defaults>
</compile_context>

<pallas_src>
import functools

import jax
import jax.numpy as jnp
from jax import lax
from jax.experimental import pallas as pl
from jax.experimental.pallas import tpu as pltpu

_SUBS = 8                              # sublanes per vreg tile
_LANES = 128                           # lanes per vreg tile
_ROWS = 8                              # (8,128) tiles per inner-loop iteration
_TILE = _SUBS * _LANES                 # elements per (8,128) tile
_SLAB = _ROWS * _TILE                  # elements per inner-loop slab
_TARGET_BLOCK_BYTES = 2 * 1024 * 1024  # ~2 MiB per GT / gen input block


def _cdiv(a, b):
    return -(-a // b)


def _rel_err_kernel(mask_pos_ref, col_ref, gt_ref, gen_ref, out_ref, *,
                    n_inner, nr, mask_width, eps, W, approx_recip):
    c = pl.program_id(0)                      # chunk index
    b = pl.program_id(1)                      # batch index
    s = mask_pos_ref[b]                       # int32 window start for batch b

    # col_ref[j] = j % W for intra-slab element j (streamed once, 32 KiB).
    # The column of absolute flattened element (chunk_base + i*_SLAB + j) is
    #   (col_ref[j] + shift_i) mod W,  shift_i = (chunk_base + i*_SLAB) % W,
    # and the selection below folds the mod + window test into two unsigned
    # range compares (one per possible wrap).
    slab_col = col_ref[...]                   # (ROWS, 8, 128) int32 in [0, W)

    d_chunk = (nr * _TILE) % W                # static Python ints
    d_slab = _SLAB % W
    off0 = (c * d_chunk) % W                  # scalar-unit ops only

    w_u = jnp.uint32(mask_width)
    eps_f = jnp.float32(eps)

    def selection(shift):
        # col in [s, s+w)  <=>  (t u< w) | ((t - W) u< w) with t = col2 - s,
        # col2 = slab_col + off in [0, 2W).  Valid for 0 <= s <= W - w.
        t = slab_col + shift                  # shift = off - s (scalar)
        return ((pltpu.bitcast(t, jnp.uint32) < w_u)
                | (pltpu.bitcast(t - W, jnp.uint32) < w_u))

    # When W divides the slab size (any power-of-two W) shift_i is identical
    # for every slab and chunk -> hoist the whole mask out of the loop.
    invariant = (d_chunk == 0) and (d_slab == 0)
    sel_hoisted = selection(-s) if invariant else None

    def body(i, acc):
        r0 = pl.multiple_of(i * _ROWS, _ROWS)
        gt = gt_ref[0, pl.ds(r0, _ROWS)].astype(jnp.float32)   # (ROWS, 8, 128)
        gn = gen_ref[0, pl.ds(r0, _ROWS)].astype(jnp.float32)

        if invariant:
            sel = sel_hoisted
        else:
            shift = (off0 + i * d_slab) % W - s                # scalar unit
            sel = selection(shift)

        num = jnp.abs(gt - gn)
        den = jnp.abs(gt) + eps_f
        if approx_recip:
            rel = num * pl.reciprocal(den, approx=True)        # EUP (v7x)
        else:
            rel = num / den                                    # exact f32
        masked = jnp.where(sel, rel, jnp.float32(0.0))
        # Leading-axis reduction only: pure VPU adds, result stays (8, 128).
        return acc + jnp.sum(masked, axis=0)

    acc = lax.fori_loop(0, n_inner, body,
                        jnp.zeros((_SUBS, _LANES), jnp.float32),
                        unroll=min(8, n_inner))
    out_ref[0, 0] = acc


def relative_error(GT, gen, mask_pos, mask_width, eps=1e-8, *,
                   approx_reciprocal=False):
    """Pallas TPU implementation of RelativeError.forward."""
    B, C, H, W = GT.shape
    w = int(mask_width)
    mask_pos = jnp.asarray(mask_pos, dtype=jnp.int32).reshape(-1)
    if mask_pos.shape[0] != B:
        raise ValueError(f"mask_pos has {mask_pos.shape[0]} entries, expected {B}")
    # NOTE: like the PyTorch module, callers must ensure 0 <= s and s + w <= W;
    # out-of-range starts would silently clip the window here.

    N = C * H * W
    R8 = _cdiv(N, _TILE)                      # number of (8,128) tiles per batch
    itemsize = jnp.dtype(GT.dtype).itemsize

    # ~2 MiB per input block (byte-based -> bf16 gets 2x the rows), rounded up
    # to a whole number of inner-loop slabs.
    rows_cap = max(_ROWS, _TARGET_BLOCK_BYTES // (_TILE * itemsize))
    NR = _cdiv(min(R8, rows_cap), _ROWS) * _ROWS
    n_chunks = _cdiv(R8, NR)
    # v7x: if the parallel grid would collapse to a single step, split the
    # chunk axis so both TensorCores get work (neutral on single-TC v5e/v6e).
    if B == 1 and n_chunks == 1 and R8 > _ROWS:
        NR = _cdiv(_cdiv(R8, 2), _ROWS) * _ROWS
        n_chunks = _cdiv(R8, NR)

    R8_pad = n_chunks * NR
    N_pad = R8_pad * _TILE
    n_inner = NR // _ROWS

    def to_blocks(x):
        x = x.reshape(B, N)                   # free row-major view of NCHW
        if N_pad != N:
            # zero padding contributes |0-0|/(|0|+eps) == 0 to the masked sum
            x = jnp.pad(x, ((0, 0), (0, N_pad - N)))
        return x.reshape(B, R8_pad, _SUBS, _LANES)

    gt_r = to_blocks(GT)
    gen_r = to_blocks(gen)

    # Single slab-sized column pattern (32 KiB): column of intra-slab element j.
    slab_col = (jnp.arange(_SLAB, dtype=jnp.int32) % W).reshape(
        _ROWS, _SUBS, _LANES)

    kernel = functools.partial(
        _rel_err_kernel, n_inner=n_inner, nr=NR, mask_width=w, eps=float(eps),
        W=W, approx_recip=bool(approx_reciprocal))

    cost = pl.CostEstimate(
        flops=8 * B * N,
        transcendentals=0,
        bytes_accessed=(2 * B * N_pad * itemsize        # GT + gen
                        + _SLAB * 4                      # slab column pattern
                        + B * n_chunks * _TILE * 4),     # partial sums out
    )

    partials = pl.pallas_call(
        kernel,
        out_shape=jax.ShapeDtypeStruct((B, n_chunks, _SUBS, _LANES), jnp.float32),
        grid_spec=pltpu.PrefetchScalarGridSpec(
            num_scalar_prefetch=1,                       # mask_pos -> SMEM
            grid=(n_chunks, B),                          # batch fastest: col blk reused
            in_specs=[
                pl.BlockSpec((_ROWS, _SUBS, _LANES),
                             lambda c, b, mp: (0, 0, 0)),
                pl.BlockSpec((1, NR, _SUBS, _LANES),
                             lambda c, b, mp: (b, c, 0, 0)),
                pl.BlockSpec((1, NR, _SUBS, _LANES),
                             lambda c, b, mp: (b, c, 0, 0)),
            ],
            out_specs=pl.BlockSpec((1, 1, _SUBS, _LANES),
                                   lambda c, b, mp: (b, c, 0, 0)),
        ),
        compiler_params=pltpu.CompilerParams(
            dimension_semantics=("parallel", "parallel"),   # megacore-friendly
            vmem_limit_bytes=32 * 1024 * 1024,              # 2 in x 2 buf x ~2 MiB
        ),
        cost_estimate=cost,
    )(mask_pos, slab_col, gt_r, gen_r)

    # TODO(synk): for real workloads with W >= 128 and w << W, switch to a
    # data-dependent index_map over the W axis (scalar-prefetched mask_pos) so
    # unmasked columns are never read (~W/w fewer HBM bytes).

    denom = jnp.float32(B * C * H * w)
    return (jnp.sum(partials) / denom).astype(GT.dtype)


def _reference(GT, gen, mask_pos, mask_width, eps=1e-8):
    """Pure-JAX reference matching the PyTorch loop semantics."""
    B = GT.shape[0]
    w = int(mask_width)
    pieces = []
    for b in range(B):
        s = int(mask_pos[b])
        g1 = GT[b, ..., s:s + w]
        g2 = gen[b, ..., s:s + w]
        pieces.append(jnp.abs(g1 - g2) / (jnp.abs(g1) + eps))
    return jnp.mean(jnp.stack(pieces))


if __name__ == "__main__":
    key = jax.random.PRNGKey(0)
    k1, k2 = jax.random.split(key)

    B, C, H, W = 2, 4, 16, 16
    mask_width = 8

    GT = jax.random.normal(k1, (B, C, H, W), dtype=jnp.float32)
    gen = jax.random.normal(k2, (B, C, H, W), dtype=jnp.float32)
    mask_pos = jnp.array([3, 5], dtype=jnp.int32)  # valid: s + w <= W

    out = relative_error(GT, gen, mask_pos, mask_width)
    out = jax.block_until_ready(out)

    ref = _reference(GT, gen, mask_pos, mask_width)
    assert jnp.allclose(out, ref, rtol=1e-5, atol=1e-6), (out, ref)

    print("KERNEL_OK")
</pallas_src>

<mosaic_0001>
module attributes {stable_mosaic.version = 11 : i64} {
  func.func @_rel_err_kernel(%arg0: i32, %arg1: i32, %arg2: memref<2xi32, #tpu.memory_space<smem>>, %arg3: memref<8x8x128xi32, #tpu.memory_space<vmem>>, %arg4: memref<1x8x8x128xf32, #tpu.memory_space<vmem>>, %arg5: memref<1x8x8x128xf32, #tpu.memory_space<vmem>>, %arg6: memref<1x1x8x128xf32, #tpu.memory_space<vmem>>) attributes {dimension_semantics = [#tpu.dimension_semantics<parallel>, #tpu.dimension_semantics<parallel>], iteration_bounds = array<i64: 1, 2>, scalar_prefetch = 1 : i64, scratch_operands = 0 : i64, tpu.core_type = #tpu.core_type<tc>, window_params = [{pipeline_mode = #tpu.pipeline_mode<synchronous>, transform_indices = @transform_0, window_bounds = array<i64: 8, 8, 128>}, {transform_indices = @transform_1, window_bounds = array<i64: 1, 8, 8, 128>}, {transform_indices = @transform_2, window_bounds = array<i64: 1, 8, 8, 128>}, {transform_indices = @transform_3, window_bounds = array<i64: 1, 1, 8, 128>}]} {
    %0 = arith.index_cast %arg1 : i32 to index
    %1 = memref.load %arg2[%0] : memref<2xi32, #tpu.memory_space<smem>>
    %c0 = arith.constant 0 : index
    %c0_0 = arith.constant 0 : index
    %c0_1 = arith.constant 0 : index
    %2 = vector.load %arg3[%c0, %c0_0, %c0_1] : memref<8x8x128xi32, #tpu.memory_space<vmem>>, vector<8x8x128xi32>
    %c0_i32 = arith.constant 0 : i32
    %3 = arith.subi %c0_i32, %1 : i32
    %4 = vector.broadcast %3 : i32 to vector<8x8x128xi32>
    %5 = arith.addi %2, %4 : vector<8x8x128xi32>
    %6 = tpu.bitcast %5 : vector<8x8x128xi32> -> vector<8x8x128xi32>
    %c8_i32 = arith.constant 8 : i32
    %7 = vector.broadcast %c8_i32 : i32 to vector<8x8x128xi32>
    %8 = arith.cmpi ult, %6, %7 : vector<8x8x128xi32>
    %c16_i32 = arith.constant 16 : i32
    %9 = vector.broadcast %c16_i32 : i32 to vector<8x8x128xi32>
    %10 = arith.subi %5, %9 : vector<8x8x128xi32>
    %11 = tpu.bitcast %10 : vector<8x8x128xi32> -> vector<8x8x128xi32>
    %c8_i32_2 = arith.constant 8 : i32
    %12 = vector.broadcast %c8_i32_2 : i32 to vector<8x8x128xi32>
    %13 = arith.cmpi ult, %11, %12 : vector<8x8x128xi32>
    %14 = arith.ori %8, %13 : vector<8x8x128xi1>
    %cst = arith.constant 0.000000e+00 : f32
    %15 = vector.broadcast %cst : f32 to vector<8x128xf32>
    %cst_3 = arith.constant 9.99999993E-9 : f32
    %c0_i32_4 = arith.constant 0 : i32
    %c8_i32_5 = arith.constant 8 : i32
    %16 = arith.muli %c0_i32_4, %c8_i32_5 : i32
    %17 = tpu.assume_multiple %16, 8 : i32
    %c0_6 = arith.constant 0 : index
    %18 = arith.index_cast %17 : i32 to index
    %c0_7 = arith.constant 0 : index
    %c0_8 = arith.constant 0 : index
    %19 = vector.load %arg4[%c0_6, %18, %c0_7, %c0_8] : memref<1x8x8x128xf32, #tpu.memory_space<vmem>>, vector<1x8x8x128xf32>
    %20 = vector.shape_cast %19 : vector<1x8x8x128xf32> to vector<8x8x128xf32>
    %c0_9 = arith.constant 0 : index
    %21 = arith.index_cast %17 : i32 to index
    %c0_10 = arith.constant 0 : index
    %c0_11 = arith.constant 0 : index
    %22 = vector.load %arg5[%c0_9, %21, %c0_10, %c0_11] : memref<1x8x8x128xf32, #tpu.memory_space<vmem>>, vector<1x8x8x128xf32>
    %23 = vector.shape_cast %22 : vector<1x8x8x128xf32> to vector<8x8x128xf32>
    %24 = arith.subf %20, %23 : vector<8x8x128xf32>
    %25 = math.absf %24 : vector<8x8x128xf32>
    %26 = math.absf %20 : vector<8x8x128xf32>
    %27 = vector.broadcast %cst_3 : f32 to vector<8x8x128xf32>
    %28 = arith.addf %26, %27 : vector<8x8x128xf32>
    %29 = arith.divf %25, %28 : vector<8x8x128xf32>
    %cst_12 = arith.constant 0.000000e+00 : f32
    %30 = vector.broadcast %cst_12 : f32 to vector<8x8x128xf32>
    %31 = arith.select %14, %29, %30 : vector<8x8x128xi1>, vector<8x8x128xf32>
    %cst_13 = arith.constant dense<0.000000e+00> : vector<8x128xf32>
    %32 = vector.multi_reduction <add>, %31, %cst_13 [0] : vector<8x8x128xf32> to vector<8x128xf32>
    %33 = arith.addf %15, %32 : vector<8x128xf32>
    %c1_i32 = arith.constant 1 : i32
    %c0_14 = arith.constant 0 : index
    %c0_15 = arith.constant 0 : index
    %c0_16 = arith.constant 0 : index
    %c0_17 = arith.constant 0 : index
    %34 = vector.load %arg6[%c0_14, %c0_15, %c0_16, %c0_17] : memref<1x1x8x128xf32, #tpu.memory_space<vmem>>, vector<1x1x8x128xf32>
    %35 = vector.shape_cast %34 : vector<1x1x8x128xf32> to vector<8x128xf32>
    %36 = vector.shape_cast %33 : vector<8x128xf32> to vector<1x1x8x128xf32>
    tpu.vector_store %arg6[%c0_14, %c0_15, %c0_16, %c0_17], %36 {strides = array<i32>} : memref<1x1x8x128xf32, #tpu.memory_space<vmem>>, vector<1x1x8x128xf32>,
    return
  }
  func.func @transform_0(%arg0: i32, %arg1: i32, %arg2: memref<2xi32, #tpu.memory_space<smem>>) -> (i32, i32, i32) {
    %c0_i32 = arith.constant 0 : i32
    %c0_i32_0 = arith.constant 0 : i32
    %c0_i32_1 = arith.constant 0 : i32
    %c0_i32_2 = arith.constant 0 : i32
    return %c0_i32, %c0_i32_0, %c0_i32_1 : i32, i32, i32
  }
  func.func @transform_1(%arg0: i32, %arg1: i32, %arg2: memref<2xi32, #tpu.memory_space<smem>>) -> (i32, i32, i32, i32) {
    %c0_i32 = arith.constant 0 : i32
    %c0_i32_0 = arith.constant 0 : i32
    %c0_i32_1 = arith.constant 0 : i32
    return %arg1, %arg0, %c0_i32, %c0_i32_0 : i32, i32, i32, i32
  }
  func.func @transform_2(%arg0: i32, %arg1: i32, %arg2: memref<2xi32, #tpu.memory_space<smem>>) -> (i32, i32, i32, i32) {
    %c0_i32 = arith.constant 0 : i32
    %c0_i32_0 = arith.constant 0 : i32
    %c0_i32_1 = arith.constant 0 : i32
    return %arg1, %arg0, %c0_i32, %c0_i32_0 : i32, i32, i32, i32
  }
  func.func @transform_3(%arg0: i32, %arg1: i32, %arg2: memref<2xi32, #tpu.memory_space<smem>>) -> (i32, i32, i32, i32) {
    %c0_i32 = arith.constant 0 : i32
    %c0_i32_0 = arith.constant 0 : i32
    %c0_i32_1 = arith.constant 0 : i32
    return %arg1, %arg0, %c0_i32, %c0_i32_0 : i32, i32, i32, i32
  }
}

</mosaic_0001>

<llo_original>
// kernel: tpu_custom_call.1
$region0: #{tpu_custom_call.1}
  #allocation0 [shape = 'u32[]', space=smem, size = 0x4, offset = 0x4, fixed_abs, tag = 'smem constant byte address 0x4 - core index']
  #allocation1 [shape = 'u32[144,128]{1,0:T(1,128)}', space=vmem, size = 0x12000, scoped, tag = 'internal scratch']
  #allocation2 [shape = 's32[1]{0}', space=sflag, size = 0x4, scoped, tag = 'scoped memory for tpu_custom_call.1']
  #allocation3 [shape = 'u8[512]{0}', space=smem, size = 0x200, scoped, tag = 'prefetched SMEM operand 0']
  %s0 = inlined_call_operand.hbm [shape: s32[2], index: 0, kind: input, shape index: {}]
  %s1 = inlined_call_operand.hbm [shape: s32[8,8,128], index: 1, kind: input, shape index: {}]
  %s2 = inlined_call_operand.hbm [shape: f32[2,8,8,128], index: 2, kind: input, shape index: {}]
  %s3 = inlined_call_operand.hbm [shape: f32[2,8,8,128], index: 3, kind: input, shape index: {}]
  %s4 = inlined_call_operand.hbm [shape: f32[2,1,8,128], index: 4, kind: output, shape index: {}]
  %s5 = sld [smem:[#allocation0]]
  $region57: #{tpu_custom_call.1} parent=0
    _
  %s7 = ssub.s32 1, %s5
  %s8 = scalar_select 0, %s7, %s5
  %10 = dma.hbm_to_smem %s0, 16, [#allocation3], [#allocation2]
  %11 = dma.done [#allocation2], 16
  %12 = sfence
  $region1: #{tpu_custom_call.1} parent=0
    #allocation4 [shape = 'u8[32768]{0}', space=vmem, size = 0x8000, scoped, tag = 'input window, operand 1, single buffered']
    #allocation5 [shape = 's32[2]{0}', space=sflag, size = 0x8, scoped, tag = 'scoped memory for tpu_custom_call.1']
    #allocation6 [shape = 's32[2]{0}', space=sflag, size = 0x8, scoped, tag = 'scoped memory for tpu_custom_call.1']
    #allocation7 [shape = 'u8[65536]{0}', space=vmem, size = 0x10000, scoped, tag = 'input window, operand 2']
    #allocation8 [shape = 's32[2]{0}', space=sflag, size = 0x8, scoped, tag = 'scoped memory for tpu_custom_call.1']
    #allocation9 [shape = 'u8[65536]{0}', space=vmem, size = 0x10000, scoped, tag = 'input window, operand 3']
    #allocation10 [shape = 'u8[8192]{0}', space=vmem, size = 0x2000, scoped, tag = 'output window, operand 0']
    %13 = vsyncpa [#allocation5], 0
    %14 = vsyncpa [#allocation8], 0
    %s15 = scalar_lea.sflag [#allocation8], 1
    %16 = vsyncpa %s15, 0
    %17 = vsyncpa [#allocation6], 0
    %s18 = scalar_lea.sflag [#allocation6], 1
    %19 = vsyncpa %s18, 0
    loop: start=0, step=1, limit=4
    $region2: #{tpu_custom_call.1} parent=1 // loop_pre_header
      _
    $region3: #{tpu_custom_call.1} parent=1 // loop_header
      %s21 = sphi 0, %s25
      %p22 = scmp.ge.s32.totalorder %s21, 4
      %s28 = sphi 0, %s40
      %s29 = sphi 0, %s36
      %s30 = sphi 0, %s28
      %s31 = sphi 0, %s29
      %s32 = sphi 0, %s30
      %s33 = sphi 0, %s31
      %s41 = sphi 0, %s41
      %s43 = sphi 0, %s41
      %s44 = sphi 0, %s43
      %s58 = sphi 0, %s44
      %s66 = sphi 0, %s68
      %s69 = sphi 0, %s66
      %s70 = sphi 0, %s69
      %s86 = sphi 0, %s70
      %s94 = sphi 0, %s96
      %s97 = sphi 0, %s94
      %s98 = sphi 0, %s97
      %s114 = sphi 0, %s98
      %s122 = sphi 0, %s124
      %s125 = sphi 0, %s122
      %s126 = sphi 0, %s125
      %s142 = sphi 0, %s126
    $region4: #{tpu_custom_call.1} parent=1 // loop_header_branch
      %24 = sbr.rel (%p22) target = $region8
    $region5: #{tpu_custom_call.1} parent=1 // loop_body
      %s26 = ssub.s32 %s21, 1
      %s27 = ssub.s32 %s21, 2
      %s34 = sadd.s32 1, %s29
      %p35 = scmp.ge.s32.totalorder %s34, 2
      %s36 = scalar_select %p35, 0, %s34
      %s37 = sadd.s32 1, %s28
      %s38 = scalar_select %p35, %s37, %s28
      %p39 = scmp.ge.s32.totalorder %s38, 1
      %s40 = scalar_select %p39, 0, %s38
      %s42 = sadd.s32 %s41, 1
      %p45 = scmp.eq.s32.totalorder %s21, 1
      %p46 = scmp.ne.s32.totalorder %s41, %s43
      %p47 = scmp.eq.s32.totalorder %s21, 0
      %p48 = por %p46, %p47
      %p49 = scmp.ne.s32.totalorder %s41, %s43
      %p50 = scmp.eq.s32.totalorder %s26, 1
      %p51 = por %p49, %p50
      %p52 = scmp.ne.s32.totalorder %s43, %s44
      %p53 = scmp.eq.s32.totalorder %s26, 0
      %p54 = por %p52, %p53
      %p55 = scmp.ne.s32.totalorder %s43, %s44
      %p56 = scmp.eq.s32.totalorder %s27, 1
      %p57 = por %p55, %p56
      %p59 = scmp.ne.s32.totalorder %s44, %s58
      %p60 = scmp.eq.s32.totalorder %s27, 0
      %p61 = por %p59, %p60
      %s62 = ssub.s32 %s29, %s36
      %s63 = ssub.s32 %s28, %s40
      %s64 = sor.u32 %s62, %s63
      %p65 = scmp.eq.s32.totalorder %s64, 0
      %s67 = sadd.s32 %s66, 1
      %s68 = scalar_select %p65, %s66, %s67
      %p71 = pneg %p65
      %p72 = scmp.eq.s32.totalorder %s21, 1
      %p73 = por %p71, %p72
      %p74 = scmp.ne.s32.totalorder %s66, %s69
      %p75 = scmp.eq.s32.totalorder %s21, 0
      %p76 = por %p74, %p75
      %p77 = scmp.ne.s32.totalorder %s66, %s69
      %p78 = scmp.eq.s32.totalorder %s26, 1
      %p79 = por %p77, %p78
      %p80 = scmp.ne.s32.totalorder %s69, %s70
      %p81 = scmp.eq.s32.totalorder %s26, 0
      %p82 = por %p80, %p81
      %p83 = scmp.ne.s32.totalorder %s69, %s70
      %p84 = scmp.eq.s32.totalorder %s27, 1
      %p85 = por %p83, %p84
      %p87 = scmp.ne.s32.totalorder %s70, %s86
      %p88 = scmp.eq.s32.totalorder %s27, 0
      %p89 = por %p87, %p88
      %s90 = ssub.s32 %s29, %s36
      %s91 = ssub.s32 %s28, %s40
      %s92 = sor.u32 %s90, %s91
      %p93 = scmp.eq.s32.totalorder %s92, 0
      %s95 = sadd.s32 %s94, 1
      %s96 = scalar_select %p93, %s94, %s95
      %p99 = pneg %p93
      %p100 = scmp.eq.s32.totalorder %s21, 1
      %p101 = por %p99, %p100
      %p102 = scmp.ne.s32.totalorder %s94, %s97
      %p103 = scmp.eq.s32.totalorder %s21, 0
      %p104 = por %p102, %p103
      %p105 = scmp.ne.s32.totalorder %s94, %s97
      %p106 = scmp.eq.s32.totalorder %s26, 1
      %p107 = por %p105, %p106
      %p108 = scmp.ne.s32.totalorder %s97, %s98
      %p109 = scmp.eq.s32.totalorder %s26, 0
      %p110 = por %p108, %p109
      %p111 = scmp.ne.s32.totalorder %s97, %s98
      %p112 = scmp.eq.s32.totalorder %s27, 1
      %p113 = por %p111, %p112
      %p115 = scmp.ne.s32.totalorder %s98, %s114
      %p116 = scmp.eq.s32.totalorder %s27, 0
      %p117 = por %p115, %p116
      %s118 = ssub.s32 %s29, %s36
      %s119 = ssub.s32 %s28, %s40
      %s120 = sor.u32 %s118, %s119
      %p121 = scmp.eq.s32.totalorder %s120, 0
      %s123 = sadd.s32 %s122, 1
      %s124 = scalar_select %p121, %s122, %s123
      %p127 = pneg %p121
      %p128 = scmp.eq.s32.totalorder %s21, 1
      %p129 = por %p127, %p128
      %p130 = scmp.ne.s32.totalorder %s122, %s125
      %p131 = scmp.eq.s32.totalorder %s21, 0
      %p132 = por %p130, %p131
      %p133 = scmp.ne.s32.totalorder %s122, %s125
      %p134 = scmp.eq.s32.totalorder %s26, 1
      %p135 = por %p133, %p134
      %p136 = scmp.ne.s32.totalorder %s125, %s126
      %p137 = scmp.eq.s32.totalorder %s26, 0
      %p138 = por %p136, %p137
      %p139 = scmp.ne.s32.totalorder %s125, %s126
      %p140 = scmp.eq.s32.totalorder %s27, 1
      %p141 = por %p139, %p140
      %p143 = scmp.ne.s32.totalorder %s126, %s142
      %p144 = scmp.eq.s32.totalorder %s27, 0
      %p145 = por %p143, %p144
      %p146 = scmp.le.s32.totalorder 1, %s21
      %p147 = scmp.lt.s32.totalorder %s21, 3
      %p148 = pnand %p146, %p147
      %p149 = pneg %p148
      // Predicated region
      $region9: #{tpu_custom_call.1} parent=5 // pred_check
        _
      $region10: #{tpu_custom_call.1} parent=5 // pred_check_branch
        %151 = sbr.rel (%p148) target = $region12
      $region11: #{tpu_custom_call.1} parent=5 // pred_region
        %s152 = ssub.s32 %s21, 1
        // Predicated region
        $region13: #{tpu_custom_call.1} parent=11 // pred_check
          %p153 = pneg %p54
        $region14: #{tpu_custom_call.1} parent=11 // pred_check_branch
          %155 = sbr.rel (%p153) target = $region16
        $region15: #{tpu_custom_call.1} parent=11 // pred_region
          %s157 = ssub.s32 1024, 1024
          %158 = vsyncadd [#allocation5], %s157
          %s159 = sshll.u32 [#allocation4], 4
          %s160 = int_to_ptr.vmem [resolvable:$true] %s159
          %165 = dma.hbm_to_vmem [thread:$0]  %s1, 1024, %s160, [#allocation5], 128, 128, 8
        $region16: #{tpu_custom_call.1} parent=11 // pred_fallthru
          _
      $region12: #{tpu_custom_call.1} parent=5 // pred_fallthru
        _
      %p166 = scmp.lt.s32.totalorder %s21, 2
      // Predicated region
      $region17: #{tpu_custom_call.1} parent=5 // pred_check
        %p167 = pneg %p166
      $region18: #{tpu_custom_call.1} parent=5 // pred_check_branch
        %169 = sbr.rel (%p167) target = $region20
      $region19: #{tpu_custom_call.1} parent=5 // pred_region
        // Predicated region
        $region21: #{tpu_custom_call.1} parent=19 // pred_check
          %p170 = pneg %p76
        $region22: #{tpu_custom_call.1} parent=19 // pred_check_branch
          %172 = sbr.rel (%p170) target = $region24
        $region23: #{tpu_custom_call.1} parent=19 // pred_region
          %s173 = sand.u32 %s21, 1
          %s174 = scalar_lea.sflag [#allocation8], %s173
          %s175 = sand.u32 %s66, 1
          %s176 = smul.addr %s175, 64
          %s177 = scalar_lea.vmem [#allocation7], %s176
          %s178 = smul.u32 8, %s28
          %s180 = ssub.s32 1024, 1024
          %181 = vsyncadd %s174, %s180
          %s182 = smul.addr %s29, 8
          %s183 = sadd.s32 %s178, %s182
          %s184 = smul.addr %s183, 128
          %s185 = scalar_lea.hbm %s2, %s184
          %s186 = sshll.u32 %s177, 4
          %s187 = int_to_ptr.vmem [resolvable:$true] %s186
          %192 = dma.hbm_to_vmem [thread:$0]  %s185, 1024, %s187, %s174, 128, 128, 8
        $region24: #{tpu_custom_call.1} parent=19 // pred_fallthru
          _
        // Predicated region
        $region25: #{tpu_custom_call.1} parent=19 // pred_check
          %p193 = pneg %p104
        $region26: #{tpu_custom_call.1} parent=19 // pred_check_branch
          %195 = sbr.rel (%p193) target = $region28
        $region27: #{tpu_custom_call.1} parent=19 // pred_region
          %s196 = sand.u32 %s21, 1
          %s197 = scalar_lea.sflag [#allocation8], %s196
          %s198 = sand.u32 %s94, 1
          %s199 = smul.addr %s198, 64
          %s200 = scalar_lea.vmem [#allocation9], %s199
          %s201 = smul.u32 8, %s28
          %s203 = ssub.s32 1024, 1024
          %204 = vsyncadd %s197, %s203
          %s205 = smul.addr %s29, 8
          %s206 = sadd.s32 %s201, %s205
          %s207 = smul.addr %s206, 128
          %s208 = scalar_lea.hbm %s3, %s207
          %s209 = sshll.u32 %s200, 4
          %s210 = int_to_ptr.vmem [resolvable:$true] %s209
          %215 = dma.hbm_to_vmem [thread:$0]  %s208, 1024, %s210, %s197, 128, 128, 8
        $region28: #{tpu_custom_call.1} parent=19 // pred_fallthru
          _
      $region20: #{tpu_custom_call.1} parent=5 // pred_fallthru
        _
      %p216 = scmp.le.s32.totalorder 1, %s21
      %p217 = scmp.lt.s32.totalorder %s21, 3
      %p218 = pnand %p216, %p217
      %p219 = pneg %p218
      // Predicated region
      $region29: #{tpu_custom_call.1} parent=5 // pred_check
        _
      $region30: #{tpu_custom_call.1} parent=5 // pred_check_branch
        %221 = sbr.rel (%p218) target = $region32
      $region31: #{tpu_custom_call.1} parent=5 // pred_region
        %s222 = ssub.s32 %s21, 1
        // Predicated region
        $region33: #{tpu_custom_call.1} parent=31 // pred_check
          %p223 = pneg %p54
        $region34: #{tpu_custom_call.1} parent=31 // pred_check_branch
          %225 = sbr.rel (%p223) target = $region36
        $region35: #{tpu_custom_call.1} parent=31 // pred_region
          %226 = dma.done [#allocation5], 1024
        $region36: #{tpu_custom_call.1} parent=31 // pred_fallthru
          _
        %s227 = sand.u32 %s26, 1
        %s228 = scalar_lea.sflag [#allocation8], %s227
        %s229 = sand.u32 %s69, 1
        %s230 = smul.addr %s229, 64
        %s231 = scalar_lea.vmem [#allocation7], %s230
        // Predicated region
        $region37: #{tpu_custom_call.1} parent=31 // pred_check
          %p232 = pneg %p82
        $region38: #{tpu_custom_call.1} parent=31 // pred_check_branch
          %234 = sbr.rel (%p232) target = $region40
        $region39: #{tpu_custom_call.1} parent=31 // pred_region
          %235 = dma.done %s228, 1024
        $region40: #{tpu_custom_call.1} parent=31 // pred_fallthru
          _
        %s236 = sand.u32 %s26, 1
        %s237 = scalar_lea.sflag [#allocation8], %s236
        %s238 = sand.u32 %s97, 1
        %s239 = smul.addr %s238, 64
        %s240 = scalar_lea.vmem [#allocation9], %s239
        // Predicated region
        $region41: #{tpu_custom_call.1} parent=31 // pred_check
          %p241 = pneg %p110
        $region42: #{tpu_custom_call.1} parent=31 // pred_check_branch
          %243 = sbr.rel (%p241) target = $region44
        $region43: #{tpu_custom_call.1} parent=31 // pred_region
          %244 = dma.done %s237, 1024
        $region44: #{tpu_custom_call.1} parent=31 // pred_fallthru
          _
        %p245 = pneg %p54
        %p246 = pneg %p51
        %s247 = sand.u32 %s26, 1
        %s248 = scalar_lea.sflag [#allocation8], %s247
        %s249 = sand.u32 %s69, 1
        %s250 = smul.addr %s249, 64
        %s251 = scalar_lea.vmem [#allocation7], %s250
        %p252 = pneg %p82
        %p253 = pneg %p79
        %s254 = sand.u32 %s26, 1
        %s255 = scalar_lea.sflag [#allocation8], %s254
        %s256 = sand.u32 %s97, 1
        %s257 = smul.addr %s256, 64
        %s258 = scalar_lea.vmem [#allocation9], %s257
        %p259 = pneg %p110
        %p260 = pneg %p107
        %p261 = pneg %p138
        %p262 = pneg %p135
        %s263 = sand.u32 %s125, 1
        %s264 = scalar_lea.sflag [#allocation6], %s263
        %s265 = sand.u32 %s125, 1
        %s266 = smul.addr %s265, 8
        %s267 = scalar_lea.vmem [#allocation10], %s266
        %s268 = smul.u32 8, %s30
        %s269 = smul.u32 8, %s30
        %s270 = sld [smem:[#allocation3 + %s31]]
        %v271 = vld [vmem:[#allocation4] sm:$0xff]
        %v272 = vld [vmem:[#allocation4 + $0x8] sm:$0xff]
        %v273 = vld [vmem:[#allocation4 + $0x10] sm:$0xff]
        %v274 = vld [vmem:[#allocation4 + $0x18] sm:$0xff]
        %v275 = vld [vmem:[#allocation4 + $0x20] sm:$0xff]
        %v276 = vld [vmem:[#allocation4 + $0x28] sm:$0xff]
        %v277 = vld [vmem:[#allocation4 + $0x30] sm:$0xff]
        %v278 = vld [vmem:[#allocation4 + $0x38] sm:$0xff]
        %s279 = ssub.s32 0, %s270
        %v280 = vstv %s279
        %v281 = vadd.s32 %v271, %v280
        %v282 = vadd.s32 %v272, %v280
        %v283 = vadd.s32 %v273, %v280
        %v284 = vadd.s32 %v274, %v280
        %v285 = vadd.s32 %v275, %v280
        %v286 = vadd.s32 %v276, %v280
        %v287 = vadd.s32 %v277, %v280
        %v288 = vadd.s32 %v278, %v280
        %vm289 = vcmp.lt.u32.totalorder %v281, 8
        %vm290 = vcmp.lt.u32.totalorder %v282, 8
        %vm291 = vcmp.lt.u32.totalorder %v283, 8
        %vm292 = vcmp.lt.u32.totalorder %v284, 8
        %vm293 = vcmp.lt.u32.totalorder %v285, 8
        %vm294 = vcmp.lt.u32.totalorder %v286, 8
        %vm295 = vcmp.lt.u32.totalorder %v287, 8
        %vm296 = vcmp.lt.u32.totalorder %v288, 8
        %v297 = vsub.s32 %v281, 16
        %v298 = vsub.s32 %v282, 16
        %v299 = vsub.s32 %v283, 16
        %v300 = vsub.s32 %v284, 16
        %v301 = vsub.s32 %v285, 16
        %v302 = vsub.s32 %v286, 16
        %v303 = vsub.s32 %v287, 16
        %v304 = vsub.s32 %v288, 16
        %vm305 = vcmp.lt.u32.totalorder %v297, 8
        %vm306 = vcmp.lt.u32.totalorder %v298, 8
        %vm307 = vcmp.lt.u32.totalorder %v299, 8
        %vm308 = vcmp.lt.u32.totalorder %v300, 8
        %vm309 = vcmp.lt.u32.totalorder %v301, 8
        %vm310 = vcmp.lt.u32.totalorder %v302, 8
        %vm311 = vcmp.lt.u32.totalorder %v303, 8
        %vm312 = vcmp.lt.u32.totalorder %v304, 8
        %vm313 = vmor %vm289, %vm305
        %vm314 = vmor %vm290, %vm306
        %vm315 = vmor %vm291, %vm307
        %vm316 = vmor %vm292, %vm308
        %vm317 = vmor %vm293, %vm309
        %vm318 = vmor %vm294, %vm310
        %vm319 = vmor %vm295, %vm311
        %vm320 = vmor %vm296, %vm312
        %s321 = smul.u32 0, 8
        %s322 = scalar_lea.vmem %s231, %s321 [#allocation7]
        %v323 = vld [vmem:[%s322] sm:$0xff]
        %v324 = vld [vmem:[%s322 + $0x8] sm:$0xff]
        %v325 = vld [vmem:[%s322 + $0x10] sm:$0xff]
        %v326 = vld [vmem:[%s322 + $0x18] sm:$0xff]
        %v327 = vld [vmem:[%s322 + $0x20] sm:$0xff]
        %v328 = vld [vmem:[%s322 + $0x28] sm:$0xff]
        %v329 = vld [vmem:[%s322 + $0x30] sm:$0xff]
        %v330 = vld [vmem:[%s322 + $0x38] sm:$0xff]
        %s331 = scalar_lea.vmem %s240, %s321 [#allocation9]
        %v332 = vld [vmem:[%s331] sm:$0xff]
        %v333 = vld [vmem:[%s331 + $0x8] sm:$0xff]
        %v334 = vld [vmem:[%s331 + $0x10] sm:$0xff]
        %v335 = vld [vmem:[%s331 + $0x18] sm:$0xff]
        %v336 = vld [vmem:[%s331 + $0x20] sm:$0xff]
        %v337 = vld [vmem:[%s331 + $0x28] sm:$0xff]
        %v338 = vld [vmem:[%s331 + $0x30] sm:$0xff]
        %v339 = vld [vmem:[%s331 + $0x38] sm:$0xff]
        %v340 = vsub.f32 %v323, %v332
        %v341 = vsub.f32 %v324, %v333
        %v342 = vsub.f32 %v325, %v334
        %v343 = vsub.f32 %v326, %v335
        %v344 = vsub.f32 %v327, %v336
        %v345 = vsub.f32 %v328, %v337
        %v346 = vsub.f32 %v329, %v338
        %v347 = vsub.f32 %v330, %v339
        %v348 = vand.u32 2147483647, %v340
        %v349 = vand.u32 2147483647, %v341
        %v350 = vand.u32 2147483647, %v342
        %v351 = vand.u32 2147483647, %v343
        %v352 = vand.u32 2147483647, %v344
        %v353 = vand.u32 2147483647, %v345
        %v354 = vand.u32 2147483647, %v346
        %v355 = vand.u32 2147483647, %v347
        %v356 = vand.u32 2147483647, %v323
        %v357 = vand.u32 2147483647, %v324
        %v358 = vand.u32 2147483647, %v325
        %v359 = vand.u32 2147483647, %v326
        %v360 = vand.u32 2147483647, %v327
        %v361 = vand.u32 2147483647, %v328
        %v362 = vand.u32 2147483647, %v329
        %v363 = vand.u32 2147483647, %v330
        %v364 = vadd.f32 %v356, 1e-08
        %v365 = vadd.f32 %v357, 1e-08
        %v366 = vadd.f32 %v358, 1e-08
        %v367 = vadd.f32 %v359, 1e-08
        %v368 = vadd.f32 %v360, 1e-08
        %v369 = vadd.f32 %v361, 1e-08
        %v370 = vadd.f32 %v362, 1e-08
        %v371 = vadd.f32 %v363, 1e-08
        %v372 = vrcp.pop %v364
        %v373 = vmul.f32 %v348, %v372
        %v374 = vrcp.pop %v365
        %v375 = vmul.f32 %v349, %v374
        %v376 = vrcp.pop %v366
        %v377 = vmul.f32 %v350, %v376
        %v378 = vrcp.pop %v367
        %v379 = vmul.f32 %v351, %v378
        %v380 = vrcp.pop %v368
        %v381 = vmul.f32 %v352, %v380
        %v382 = vrcp.pop %v369
        %v383 = vmul.f32 %v353, %v382
        %v384 = vrcp.pop %v370
        %v385 = vmul.f32 %v354, %v384
        %v386 = vrcp.pop %v371
        %v387 = vmul.f32 %v355, %v386
        %v388 = vsel %vm313, %v373, 0.0
        %v389 = vsel %vm314, %v375, 0.0
        %v390 = vsel %vm315, %v377, 0.0
        %v391 = vsel %vm316, %v379, 0.0
        %v392 = vsel %vm317, %v381, 0.0
        %v393 = vsel %vm318, %v383, 0.0
        %v394 = vsel %vm319, %v385, 0.0
        %v395 = vsel %vm320, %v387, 0.0
        %v396 = vadd.f32 %v388, %v389
        %v397 = vadd.f32 %v396, %v390
        %v398 = vadd.f32 %v397, %v391
        %v399 = vadd.f32 %v398, %v392
        %v400 = vadd.f32 %v399, %v393
        %v401 = vadd.f32 %v400, %v394
        %v402 = vadd.f32 %v401, %v395
        %v403 = vadd.f32 %v402, 0.0
        %404 = vst [vmem:[%s267] sm:$0xff] %v403
        %s405 = sand.u32 %s125, 1
        %s406 = scalar_lea.sflag [#allocation6], %s405
        %s407 = sand.u32 %s125, 1
        %s408 = smul.addr %s407, 8
        %s409 = scalar_lea.vmem [#allocation10], %s408
        // Predicated region
        $region45: #{tpu_custom_call.1} parent=31 // pred_check
          %p410 = pneg %p135
        $region46: #{tpu_custom_call.1} parent=31 // pred_check_branch
          %412 = sbr.rel (%p410) target = $region48
        $region47: #{tpu_custom_call.1} parent=31 // pred_region
          %s414 = ssub.s32 128, 128
          %415 = vsyncadd %s406, %s414
          %s416 = sadd.s32 %s30, %s31
          %s417 = smul.addr %s416, 128
          %s418 = scalar_lea.hbm %s4, %s417
          %s420 = sshll.u32 %s409, 4
          %s421 = int_to_ptr.vmem [resolvable:$true] %s420
          %423 = dma.vmem_to_hbm [thread:$0]  %s421, 128, %s418, %s406
        $region48: #{tpu_custom_call.1} parent=31 // pred_fallthru
          _
      $region32: #{tpu_custom_call.1} parent=5 // pred_fallthru
        _
      %p424 = scmp.le.s32.totalorder 2, %s21
      // Predicated region
      $region49: #{tpu_custom_call.1} parent=5 // pred_check
        %p425 = pneg %p424
      $region50: #{tpu_custom_call.1} parent=5 // pred_check_branch
        %427 = sbr.rel (%p425) target = $region52
      $region51: #{tpu_custom_call.1} parent=5 // pred_region
        %s428 = ssub.s32 %s21, 2
        // Predicated region
        $region53: #{tpu_custom_call.1} parent=51 // pred_check
          %p429 = pneg %p141
        $region54: #{tpu_custom_call.1} parent=51 // pred_check_branch
          %431 = sbr.rel (%p429) target = $region56
        $region55: #{tpu_custom_call.1} parent=51 // pred_region
          %s432 = sand.u32 %s126, 1
          %s433 = scalar_lea.sflag [#allocation6], %s432
          %s434 = sand.u32 %s126, 1
          %s435 = smul.addr %s434, 8
          %s436 = scalar_lea.vmem [#allocation10], %s435
          %437 = dma.done %s433, 128
        $region56: #{tpu_custom_call.1} parent=51 // pred_fallthru
          _
      $region52: #{tpu_custom_call.1} parent=5 // pred_fallthru
        _
    $region6: #{tpu_custom_call.1} parent=1 // loop_footer
      %s25 = sadd.s32 1, %s21
    $region7: #{tpu_custom_call.1} parent=1 // loop_footer_branch
      %20 = sbr.rel target = $region3
    $region8: #{tpu_custom_call.1} parent=1 // loop_exit
      _
    %438 = vsyncpa [#allocation5], 1
    %s439 = scalar_lea.sflag [#allocation5], 1
    %440 = vsyncpa %s439, 1
    %441 = vsyncpa [#allocation8], 1
    %s442 = scalar_lea.sflag [#allocation8], 1
    %443 = vsyncpa %s442, 1
    %444 = vsyncpa [#allocation6], 1
    %s445 = scalar_lea.sflag [#allocation6], 1
    %446 = vsyncpa %s445, 1

</llo_original>
